<compile_context>
chip_gen: v6e
topology: v6e:2x2x1
jax: 0.10.0
libtpu: 0.0.40
codegen_flags: <defaults>
</compile_context>

<pallas_src>
import functools

import jax
import jax.numpy as jnp
from jax.experimental import pallas as pl
from jax.experimental.pallas import tpu as pltpu

LANE = 128


# --------------------------------------------------------------------------
# Kernels
# --------------------------------------------------------------------------
def _fc_epilogue(avg, w1_ref, b1_ref, w2_ref, b2_ref, out_ref):
    """gate_c_fc_0 (BN folded) + ReLU + gate_c_fc_final, once per batch block."""
    h = jnp.dot(avg, w1_ref[...], preferred_element_type=jnp.float32)
    h = jnp.maximum(h + b1_ref[...], 0.0)
    g = jnp.dot(h, w2_ref[...], preferred_element_type=jnp.float32)
    out_ref[...] = (g + b2_ref[...]).astype(out_ref.dtype)


def channel_gate_kernel_single(x_ref, w1_ref, b1_ref, w2_ref, b2_ref, out_ref,
                               *, hw):
    """Whole (small) feature map fits one tile: one reduce + FCs per block."""
    x = x_ref[...].astype(jnp.float32)                  # (bb, C, HW)
    avg = jnp.sum(x, axis=-1) * (1.0 / hw)              # (bb, C)
    _fc_epilogue(avg, w1_ref, b1_ref, w2_ref, b2_ref, out_ref)


def _accumulate(x_ref, acc3_ref, *, valid, group=4):
    """Add the first `valid` (static) spatial lanes of this tile into acc3.

    Lane-aligned 128-wide slices + VPU adds only; the cross-lane reduce is
    deferred to the epilogue.  Chunks fully past `valid` are skipped at trace
    time; at most one partial trailing chunk is masked.
    """
    nk_full = valid // LANE
    rem = valid - nk_full * LANE
    # Full 128-wide chunks, grouped to cut accumulator scratch traffic ~4x.
    for k0 in range(0, nk_full, group):
        kend = min(k0 + group, nk_full)
        part = x_ref[:, :, pl.ds(k0 * LANE, LANE)].astype(jnp.float32)
        for k in range(k0 + 1, kend):
            part = part + x_ref[:, :, pl.ds(k * LANE, LANE)].astype(jnp.float32)
        acc3_ref[...] += part
    if rem > 0:
        # Ragged trailing chunk (only ever on the last tile): mask OOB lanes.
        xk = x_ref[:, :, pl.ds(nk_full * LANE, LANE)].astype(jnp.float32)
        col = jax.lax.broadcasted_iota(jnp.int32, (1, 1, LANE), 2)
        acc3_ref[...] += jnp.where(col < rem, xk, 0.0)


def channel_gate_kernel_multi(x_ref, w1_ref, b1_ref, w2_ref, b2_ref, out_ref,
                              acc3_ref, *, hw, thw, ns):
    """Grid = (batch_blocks, spatial_tiles); spatial (reduction) axis last."""
    s = pl.program_id(1)

    @pl.when(s == 0)
    def _():
        acc3_ref[...] = jnp.zeros_like(acc3_ref)

    last_valid = hw - (ns - 1) * thw                   # static
    if last_valid == thw:
        # HW divides the tile evenly: identical, mask-free body on every tile.
        _accumulate(x_ref, acc3_ref, valid=thw)
    else:
        # Mask only on the final (ragged) tile; steady state stays mask-free.
        @pl.when(s < ns - 1)
        def _():
            _accumulate(x_ref, acc3_ref, valid=thw)

        @pl.when(s == ns - 1)
        def _():
            _accumulate(x_ref, acc3_ref, valid=last_valid)

    @pl.when(s == ns - 1)
    def _():
        avg = jnp.sum(acc3_ref[...], axis=-1) * (1.0 / hw)   # (bb, C)
        _fc_epilogue(avg, w1_ref, b1_ref, w2_ref, b2_ref, out_ref)


# --------------------------------------------------------------------------
# Wrapper
# --------------------------------------------------------------------------
def channel_gate_pallas(x, params, *, bn_eps=1e-5, spatial_tile=2048,
                        compute_dtype=jnp.bfloat16):
    """x: (B, C, H, W); returns the (B, C) channel gate (pre-broadcast)."""
    B, C, H, W = x.shape
    HW = H * W
    w1, b1, gamma, beta, mean, var, w2, b2 = params
    hid = w1.shape[1]

    # Fold eval-mode BatchNorm1d into the first Linear (host side, free).
    scale = gamma * jax.lax.rsqrt(var + bn_eps)             # (1, hid)
    w1f = (w1 * scale).astype(jnp.float32)                  # (C, hid)
    b1f = ((b1 - mean) * scale + beta).astype(jnp.float32)  # (1, hid)
    w2f = w2.astype(jnp.float32)
    b2f = b2.astype(jnp.float32)

    out_dtype = x.dtype
    if compute_dtype is not None and x.dtype != compute_dtype:
        # Halve HBM read traffic; accumulation inside the kernel stays f32.
        x = x.astype(compute_dtype)
    x_flat = x.reshape(B, C, HW)                            # lane axis = spatial
    itemsize = jnp.dtype(x_flat.dtype).itemsize

    # ---- batch block: (8,128)-rule safe and VMEM safe --------------------
    if B <= 8:
        bb, b_pad = B, B
    elif B % 8 == 0:
        bb, b_pad = 8, B
    else:
        bb, b_pad = 8, ((B + 7) // 8) * 8
        x_flat = jnp.pad(x_flat, ((0, b_pad - B), (0, 0), (0, 0)))

    # ---- spatial tile: multiple of 128 (or full HW), VMEM-budgeted -------
    budget = 24 << 20                       # double-buffered x blocks, bytes
    single_cost = bb * C * HW * (2 * itemsize + 4)   # 2 bufs + f32 temp
    if HW <= LANE or (HW <= spatial_tile and single_cost <= budget):
        use_single = True
        thw, n_s = HW, 1
    else:
        use_single = False
        thw = max(LANE, (min(spatial_tile, HW) // LANE) * LANE)
        while thw > LANE and 2 * bb * C * thw * itemsize > budget:
            thw = max(LANE, ((thw // 2) // LANE) * LANE)
        n_s = pl.cdiv(HW, thw)
    n_b = b_pad // bb

    # ---- VMEM limit: actual need + headroom (v7x has only 64 MiB / TC) ---
    weight_bytes = (C * hid + hid + hid * C + C) * 4
    need = (2 * bb * C * thw * itemsize        # double-buffered x blocks
            + 2 * weight_bytes                 # (double-buffered) weights
            + bb * C * LANE * 4                # acc3 scratch
            + bb * C * thw * 4                 # f32 temp (single-tile path)
            + 2 * bb * C * jnp.dtype(out_dtype).itemsize
            + (2 << 20))
    vmem_limit = int(min(max(need, 32 << 20), 48 << 20))

    weight_args = (w1f, b1f, w2f, b2f)

    if use_single:
        kernel = functools.partial(channel_gate_kernel_single, hw=HW)
        gate = pl.pallas_call(
            kernel,
            out_shape=jax.ShapeDtypeStruct((b_pad, C), out_dtype),
            grid_spec=pltpu.PrefetchScalarGridSpec(
                num_scalar_prefetch=0,
                grid=(n_b,),
                in_specs=[
                    pl.BlockSpec((bb, C, thw), lambda b: (b, 0, 0)),   # x
                    pl.BlockSpec((C, hid), lambda b: (0, 0)),          # w1 (BN-folded)
                    pl.BlockSpec((1, hid), lambda b: (0, 0)),          # b1 (BN-folded)
                    pl.BlockSpec((hid, C), lambda b: (0, 0)),          # w2
                    pl.BlockSpec((1, C), lambda b: (0, 0)),            # b2
                ],
                out_specs=pl.BlockSpec((bb, C), lambda b: (b, 0)),
            ),
            compiler_params=pltpu.CompilerParams(
                dimension_semantics=("parallel",),
                vmem_limit_bytes=vmem_limit,
            ),
        )(x_flat, *weight_args)
    else:
        kernel = functools.partial(channel_gate_kernel_multi,
                                   hw=HW, thw=thw, ns=n_s)
        gate = pl.pallas_call(
            kernel,
            out_shape=jax.ShapeDtypeStruct((b_pad, C), out_dtype),
            grid_spec=pltpu.PrefetchScalarGridSpec(
                num_scalar_prefetch=0,
                grid=(n_b, n_s),
                in_specs=[
                    pl.BlockSpec((bb, C, thw), lambda b, s: (b, 0, s)),  # x tile
                    pl.BlockSpec((C, hid), lambda b, s: (0, 0)),         # w1 (BN-folded)
                    pl.BlockSpec((1, hid), lambda b, s: (0, 0)),         # b1 (BN-folded)
                    pl.BlockSpec((hid, C), lambda b, s: (0, 0)),         # w2
                    pl.BlockSpec((1, C), lambda b, s: (0, 0)),           # b2
                ],
                out_specs=pl.BlockSpec((bb, C), lambda b, s: (b, 0)),
                scratch_shapes=[pltpu.VMEM((bb, C, LANE), jnp.float32)],
            ),
            compiler_params=pltpu.CompilerParams(
                dimension_semantics=("parallel", "arbitrary"),
                vmem_limit_bytes=vmem_limit,
            ),
        )(x_flat, *weight_args)

    return gate[:B]


def channel_gate(x, params, *, spatial_tile=2048, compute_dtype=jnp.bfloat16):
    """Module-equivalent output: the gate expanded to the input shape.

    The broadcast stays outside the kernel (lazy / fused by XLA into the
    x * gate multiply inside BAM), so HBM write traffic is B*C, not B*C*H*W.
    """
    B, C, H, W = x.shape
    gate = channel_gate_pallas(x, params, spatial_tile=spatial_tile,
                               compute_dtype=compute_dtype)
    return jnp.broadcast_to(gate[:, :, None, None], (B, C, H, W))


# --------------------------------------------------------------------------
# Synthetic params + reference
# --------------------------------------------------------------------------
def make_params(key, gate_channel, reduction_ratio=16):
    """Deterministic synthetic parameters matching the nn.Module shapes."""
    hid = gate_channel // reduction_ratio
    k = jax.random.split(key, 8)
    bound1 = 1.0 / jnp.sqrt(gate_channel)
    bound2 = 1.0 / jnp.sqrt(hid)
    w1 = jax.random.uniform(k[0], (gate_channel, hid), jnp.float32, -bound1, bound1)
    b1 = jax.random.uniform(k[1], (1, hid), jnp.float32, -bound1, bound1)
    gamma = 1.0 + 0.1 * jax.random.normal(k[2], (1, hid), jnp.float32)
    beta = 0.1 * jax.random.normal(k[3], (1, hid), jnp.float32)
    mean = 0.05 * jax.random.normal(k[4], (1, hid), jnp.float32)
    var = 1.0 + 0.1 * jax.random.uniform(k[5], (1, hid), jnp.float32)
    w2 = jax.random.uniform(k[6], (hid, gate_channel), jnp.float32, -bound2, bound2)
    b2 = jax.random.uniform(k[7], (1, gate_channel), jnp.float32, -bound2, bound2)
    return (w1, b1, gamma, beta, mean, var, w2, b2)


def channel_gate_reference(x, params):
    """Plain-JAX reference (eval-mode BN) for correctness check."""
    w1, b1, gamma, beta, mean, var, w2, b2 = params
    avg = jnp.mean(x, axis=(2, 3))                                     # (B, C)
    h = avg @ w1 + b1
    h = (h - mean) * jax.lax.rsqrt(var + 1e-5) * gamma + beta
    h = jnp.maximum(h, 0.0)
    g = h @ w2 + b2                                                    # (B, C)
    return jnp.broadcast_to(g[:, :, None, None], x.shape)


if __name__ == "__main__":
    key = jax.random.PRNGKey(0)
    kx1, kx2, kx3, kp = jax.random.split(key, 4)

    # gate_channel=64, reduction_ratio=16 -> hidden=4 (smallest VGG block width)
    C = 64
    params = make_params(kp, C, reduction_ratio=16)

    # Case 1: multi-tile path, even tiles, f32 inputs (exact accumulation).
    B, H, W = 2, 16, 16
    x1 = jax.random.normal(kx1, (B, C, H, W), dtype=jnp.float32)
    out1 = jax.block_until_ready(
        channel_gate(x1, params, spatial_tile=128, compute_dtype=None))
    ref1 = channel_gate_reference(x1, params)
    assert out1.shape == x1.shape
    assert jnp.allclose(out1, ref1, rtol=1e-3, atol=1e-3), "mismatch (even tiles, f32)"

    # Case 2: ragged trailing spatial tile (HW=144, tile=128), bf16 inputs.
    B, H, W = 2, 12, 12
    x2 = jax.random.normal(kx2, (B, C, H, W), dtype=jnp.float32)
    out2 = jax.block_until_ready(channel_gate(x2, params, spatial_tile=128))
    ref2 = channel_gate_reference(x2, params)
    assert out2.shape == x2.shape
    assert jnp.allclose(out2, ref2, rtol=1e-2, atol=1e-2), "mismatch (ragged, bf16)"

    # Case 3: single-tile path, multiple batch blocks, B not a multiple of 8
    # (exercises batch padding + the 'parallel' multi-block grid), bf16 inputs.
    B, H, W = 10, 8, 8
    x3 = jax.random.normal(kx3, (B, C, H, W), dtype=jnp.float32)
    out3 = jax.block_until_ready(channel_gate(x3, params))
    ref3 = channel_gate_reference(x3, params)
    assert out3.shape == x3.shape
    assert jnp.allclose(out3, ref3, rtol=1e-2, atol=1e-2), "mismatch (padded batch, bf16)"

    print("KERNEL_OK")
</pallas_src>

<mosaic_0001>
module attributes {stable_mosaic.version = 11 : i64} {
  func.func @channel_gate_kernel_multi(%arg0: i32, %arg1: i32, %arg2: memref<2x64x128xf32, #tpu.memory_space<vmem>>, %arg3: memref<64x4xf32, #tpu.memory_space<vmem>>, %arg4: memref<1x4xf32, #tpu.memory_space<vmem>>, %arg5: memref<4x64xf32, #tpu.memory_space<vmem>>, %arg6: memref<1x64xf32, #tpu.memory_space<vmem>>, %arg7: memref<2x64xf32, #tpu.memory_space<vmem>>, %arg8: memref<2x64x128xf32, #tpu.memory_space<vmem>>) attributes {dimension_semantics = [#tpu.dimension_semantics<parallel>, #tpu.dimension_semantics<arbitrary>], iteration_bounds = array<i64: 1, 2>, scalar_prefetch = 0 : i64, scratch_operands = 1 : i64, tpu.core_type = #tpu.core_type<tc>, window_params = [{transform_indices = @transform_0, window_bounds = array<i64: 2, 64, 128>}, {pipeline_mode = #tpu.pipeline_mode<synchronous>, transform_indices = @transform_1, window_bounds = array<i64: 64, 4>}, {pipeline_mode = #tpu.pipeline_mode<synchronous>, transform_indices = @transform_2, window_bounds = array<i64: 1, 4>}, {pipeline_mode = #tpu.pipeline_mode<synchronous>, transform_indices = @transform_3, window_bounds = array<i64: 4, 64>}, {pipeline_mode = #tpu.pipeline_mode<synchronous>, transform_indices = @transform_4, window_bounds = array<i64: 1, 64>}, {transform_indices = @transform_5, window_bounds = array<i64: 2, 64>}]} {
    %c0_i32 = arith.constant 0 : i32
    %0 = arith.cmpi eq, %arg1, %c0_i32 : i32
    %1 = arith.extui %0 : i1 to i32
    %c0_i32_0 = arith.constant 0 : i32
    %2 = arith.cmpi ne, %1, %c0_i32_0 : i32
    scf.if %2 {
      %cst = arith.constant 0.000000e+00 : f32
      %10 = vector.broadcast %cst : f32 to vector<2x64x128xf32>
      %c0_10 = arith.constant 0 : index
      %c0_11 = arith.constant 0 : index
      %c0_12 = arith.constant 0 : index
      %11 = vector.load %arg8[%c0_10, %c0_11, %c0_12] : memref<2x64x128xf32, #tpu.memory_space<vmem>>, vector<2x64x128xf32>
      tpu.vector_store %arg8[%c0_10, %c0_11, %c0_12], %10 {strides = array<i32>} : memref<2x64x128xf32, #tpu.memory_space<vmem>>, vector<2x64x128xf32>,
    } else {
    }
    %c0 = arith.constant 0 : index
    %c0_1 = arith.constant 0 : index
    %c0_2 = arith.constant 0 : index
    %3 = vector.load %arg2[%c0, %c0_1, %c0_2] : memref<2x64x128xf32, #tpu.memory_space<vmem>>, vector<2x64x128xf32>
    %c0_3 = arith.constant 0 : index
    %c0_4 = arith.constant 0 : index
    %c0_5 = arith.constant 0 : index
    %4 = vector.load %arg8[%c0_3, %c0_4, %c0_5] : memref<2x64x128xf32, #tpu.memory_space<vmem>>, vector<2x64x128xf32>
    %5 = arith.addf %4, %3 : vector<2x64x128xf32>
    %c0_6 = arith.constant 0 : index
    %c0_7 = arith.constant 0 : index
    %c0_8 = arith.constant 0 : index
    %6 = vector.load %arg8[%c0_6, %c0_7, %c0_8] : memref<2x64x128xf32, #tpu.memory_space<vmem>>, vector<2x64x128xf32>
    tpu.vector_store %arg8[%c0_6, %c0_7, %c0_8], %5 {strides = array<i32>} : memref<2x64x128xf32, #tpu.memory_space<vmem>>, vector<2x64x128xf32>,
    %c1_i32 = arith.constant 1 : i32
    %7 = arith.cmpi eq, %arg1, %c1_i32 : i32
    %8 = arith.extui %7 : i1 to i32
    %c0_i32_9 = arith.constant 0 : i32
    %9 = arith.cmpi ne, %8, %c0_i32_9 : i32
    scf.if %9 {
      %c0_10 = arith.constant 0 : index
      %c0_11 = arith.constant 0 : index
      %c0_12 = arith.constant 0 : index
      %10 = vector.load %arg8[%c0_10, %c0_11, %c0_12] : memref<2x64x128xf32, #tpu.memory_space<vmem>>, vector<2x64x128xf32>
      %cst = arith.constant dense<0.000000e+00> : vector<2x64xf32>
      %11 = vector.multi_reduction <add>, %10, %cst [2] : vector<2x64x128xf32> to vector<2x64xf32>
      %cst_13 = arith.constant 3.906250e-03 : f32
      %12 = vector.broadcast %cst_13 : f32 to vector<2x64xf32>
      %13 = arith.mulf %11, %12 : vector<2x64xf32>
      %c0_14 = arith.constant 0 : index
      %c0_15 = arith.constant 0 : index
      %14 = vector.load %arg3[%c0_14, %c0_15] : memref<64x4xf32, #tpu.memory_space<vmem>>, vector<64x4xf32>
      %cst_16 = arith.constant dense<0.000000e+00> : vector<2x4xf32>
      %15 = tpu.matmul %13, %14, %cst_16 {dimension_numbers = #tpu.dot_dimension_numbers<[1], [0], [0], [1], [0, 0, 1, 1], [], []>} : vector<2x64xf32>, vector<64x4xf32>, vector<2x4xf32> -> vector<2x4xf32>
      %c0_17 = arith.constant 0 : index
      %c0_18 = arith.constant 0 : index
      %16 = vector.load %arg4[%c0_17, %c0_18] : memref<1x4xf32, #tpu.memory_space<vmem>>, vector<1x4xf32>
      %17 = vector.broadcast %16 : vector<1x4xf32> to vector<2x4xf32>
      %18 = arith.addf %15, %17 : vector<2x4xf32>
      %cst_19 = arith.constant 0.000000e+00 : f32
      %19 = vector.broadcast %cst_19 : f32 to vector<2x4xf32>
      %20 = arith.maximumf %18, %19 : vector<2x4xf32>
      %c0_20 = arith.constant 0 : index
      %c0_21 = arith.constant 0 : index
      %21 = vector.load %arg5[%c0_20, %c0_21] : memref<4x64xf32, #tpu.memory_space<vmem>>, vector<4x64xf32>
      %cst_22 = arith.constant dense<0.000000e+00> : vector<2x64xf32>
      %22 = tpu.matmul %20, %21, %cst_22 {dimension_numbers = #tpu.dot_dimension_numbers<[1], [0], [0], [1], [0, 0, 1, 1], [], []>} : vector<2x4xf32>, vector<4x64xf32>, vector<2x64xf32> -> vector<2x64xf32>
      %c0_23 = arith.constant 0 : index
      %c0_24 = arith.constant 0 : index
      %23 = vector.load %arg6[%c0_23, %c0_24] : memref<1x64xf32, #tpu.memory_space<vmem>>, vector<1x64xf32>
      %24 = vector.broadcast %23 : vector<1x64xf32> to vector<2x64xf32>
      %25 = arith.addf %22, %24 : vector<2x64xf32>
      %c0_25 = arith.constant 0 : index
      %c0_26 = arith.constant 0 : index
      %26 = vector.load %arg7[%c0_25, %c0_26] : memref<2x64xf32, #tpu.memory_space<vmem>>, vector<2x64xf32>
      tpu.vector_store %arg7[%c0_25, %c0_26], %25 {strides = array<i32>} : memref<2x64xf32, #tpu.memory_space<vmem>>, vector<2x64xf32>,
    } else {
    }
    return
  }
  func.func @transform_0(%arg0: i32, %arg1: i32) -> (i32, i32, i32) {
    %c0_i32 = arith.constant 0 : i32
    %c0_i32_0 = arith.constant 0 : i32
    return %arg0, %c0_i32, %arg1 : i32, i32, i32
  }
  func.func @transform_1(%arg0: i32, %arg1: i32) -> (i32, i32) {
    %c0_i32 = arith.constant 0 : i32
    %c0_i32_0 = arith.constant 0 : i32
    %c0_i32_1 = arith.constant 0 : i32
    return %c0_i32, %c0_i32_0 : i32, i32
  }
  func.func @transform_2(%arg0: i32, %arg1: i32) -> (i32, i32) {
    %c0_i32 = arith.constant 0 : i32
    %c0_i32_0 = arith.constant 0 : i32
    %c0_i32_1 = arith.constant 0 : i32
    return %c0_i32, %c0_i32_0 : i32, i32
  }
  func.func @transform_3(%arg0: i32, %arg1: i32) -> (i32, i32) {
    %c0_i32 = arith.constant 0 : i32
    %c0_i32_0 = arith.constant 0 : i32
    %c0_i32_1 = arith.constant 0 : i32
    return %c0_i32, %c0_i32_0 : i32, i32
  }
  func.func @transform_4(%arg0: i32, %arg1: i32) -> (i32, i32) {
    %c0_i32 = arith.constant 0 : i32
    %c0_i32_0 = arith.constant 0 : i32
    %c0_i32_1 = arith.constant 0 : i32
    return %c0_i32, %c0_i32_0 : i32, i32
  }
  func.func @transform_5(%arg0: i32, %arg1: i32) -> (i32, i32) {
    %c0_i32 = arith.constant 0 : i32
    %c0_i32_0 = arith.constant 0 : i32
    return %arg0, %c0_i32 : i32, i32
  }
}

</mosaic_0001>

<llo_original>
// kernel: tpu_custom_call.1
$region0: #{tpu_custom_call.1}
  #allocation0 [shape = 'u32[]', space=smem, size = 0x4, offset = 0x4, fixed_abs, tag = 'smem constant byte address 0x4 - core index']
  #allocation1 [shape = 'u32[144,128]{1,0:T(1,128)}', space=vmem, size = 0x12000, scoped, tag = 'internal scratch']
  #allocation2 [shape = 'f32[2,64,128]{2,1,0:T(8,128)}', space=vmem, size = 0x10000, scoped, tag = 'scratch operand']
  %s0 = inlined_call_operand.hbm [shape: f32[2,64,256], index: 0, kind: input, shape index: {}]
  %s1 = inlined_call_operand.vmem [shape: f32[64,4], index: 1, kind: input, shape index: {}]
  %s2 = inlined_call_operand.vmem [shape: f32[1,4], index: 2, kind: input, shape index: {}]
  %s3 = inlined_call_operand.vmem [shape: f32[4,64], index: 3, kind: input, shape index: {}]
  %s4 = inlined_call_operand.vmem [shape: f32[1,64], index: 4, kind: input, shape index: {}]
  %s5 = inlined_call_operand.hbm [shape: f32[2,64], index: 5, kind: output, shape index: {}]
  %s6 = sld [smem:[#allocation0]]
  $region65: #{tpu_custom_call.1} parent=0
    _
  %s8 = ssub.s32 1, %s6
  %s9 = scalar_select 0, %s8, %s6
  $region1: #{tpu_custom_call.1} parent=0
    #allocation3 [shape = 'u8[131072]{0}', space=vmem, size = 0x20000, scoped, tag = 'input window, operand 0']
    #allocation4 [shape = 's32[2]{0}', space=sflag, size = 0x8, scoped, tag = 'scoped memory for tpu_custom_call.1']
    #allocation5 [shape = 's32[2]{0}', space=sflag, size = 0x8, scoped, tag = 'scoped memory for tpu_custom_call.1']
    #allocation6 [shape = 'u8[1024]{0}', space=vmem, size = 0x400, scoped, tag = 'output window, operand 0, single buffered']
    %10 = vsyncpa [#allocation4], 0
    %s11 = scalar_lea.sflag [#allocation4], 1
    %12 = vsyncpa %s11, 0
    %13 = vsyncpa [#allocation5], 0
    loop: start=0, step=1, limit=4
    $region2: #{tpu_custom_call.1} parent=1 // loop_pre_header
      _
    $region3: #{tpu_custom_call.1} parent=1 // loop_header
      %s15 = sphi 0, %s19
      %p16 = scmp.ge.s32.totalorder %s15, 4
      %s22 = sphi 0, %s34
      %s23 = sphi 0, %s30
      %s24 = sphi 0, %s22
      %s25 = sphi 0, %s23
      %s26 = sphi 0, %s24
      %s27 = sphi 0, %s25
      %s39 = sphi 0, %s41
      %s42 = sphi 0, %s39
      %s43 = sphi 0, %s42
      %s59 = sphi 0, %s43
      %s63 = sphi 0, %s63
      %s65 = sphi 0, %s63
      %s66 = sphi 0, %s65
      %s80 = sphi 0, %s66
      %s84 = sphi 0, %s84
      %s86 = sphi 0, %s84
      %s87 = sphi 0, %s86
      %s101 = sphi 0, %s87
      %s105 = sphi 0, %s105
      %s107 = sphi 0, %s105
      %s108 = sphi 0, %s107
      %s122 = sphi 0, %s108
      %s126 = sphi 0, %s126
      %s128 = sphi 0, %s126
      %s129 = sphi 0, %s128
      %s143 = sphi 0, %s129
      %s149 = sphi 0, %s151
      %s152 = sphi 0, %s149
      %s153 = sphi 0, %s152
      %s169 = sphi 0, %s153
    $region4: #{tpu_custom_call.1} parent=1 // loop_header_branch
      %18 = sbr.rel (%p16) target = $region8
    $region5: #{tpu_custom_call.1} parent=1 // loop_body
      %s20 = ssub.s32 %s15, 1
      %s21 = ssub.s32 %s15, 2
      %s28 = sadd.s32 1, %s23
      %p29 = scmp.ge.s32.totalorder %s28, 2
      %s30 = scalar_select %p29, 0, %s28
      %s31 = sadd.s32 1, %s22
      %s32 = scalar_select %p29, %s31, %s22
      %p33 = scmp.ge.s32.totalorder %s32, 1
      %s34 = scalar_select %p33, 0, %s32
      %s35 = ssub.s32 %s22, %s34
      %s36 = ssub.s32 %s23, %s30
      %s37 = sor.u32 %s35, %s36
      %p38 = scmp.eq.s32.totalorder %s37, 0
      %s40 = sadd.s32 %s39, 1
      %s41 = scalar_select %p38, %s39, %s40
      %p44 = pneg %p38
      %p45 = scmp.eq.s32.totalorder %s15, 1
      %p46 = por %p44, %p45
      %p47 = scmp.ne.s32.totalorder %s39, %s42
      %p48 = scmp.eq.s32.totalorder %s15, 0
      %p49 = por %p47, %p48
      %p50 = scmp.ne.s32.totalorder %s39, %s42
      %p51 = scmp.eq.s32.totalorder %s20, 1
      %p52 = por %p50, %p51
      %p53 = scmp.ne.s32.totalorder %s42, %s43
      %p54 = scmp.eq.s32.totalorder %s20, 0
      %p55 = por %p53, %p54
      %p56 = scmp.ne.s32.totalorder %s42, %s43
      %p57 = scmp.eq.s32.totalorder %s21, 1
      %p58 = por %p56, %p57
      %p60 = scmp.ne.s32.totalorder %s43, %s59
      %p61 = scmp.eq.s32.totalorder %s21, 0
      %p62 = por %p60, %p61
      %s64 = sadd.s32 %s63, 1
      %p67 = scmp.eq.s32.totalorder %s15, 1
      %p68 = scmp.ne.s32.totalorder %s63, %s65
      %p69 = scmp.eq.s32.totalorder %s15, 0
      %p70 = por %p68, %p69
      %p71 = scmp.ne.s32.totalorder %s63, %s65
      %p72 = scmp.eq.s32.totalorder %s20, 1
      %p73 = por %p71, %p72
      %p74 = scmp.ne.s32.totalorder %s65, %s66
      %p75 = scmp.eq.s32.totalorder %s20, 0
      %p76 = por %p74, %p75
      %p77 = scmp.ne.s32.totalorder %s65, %s66
      %p78 = scmp.eq.s32.totalorder %s21, 1
      %p79 = por %p77, %p78
      %p81 = scmp.ne.s32.totalorder %s66, %s80
      %p82 = scmp.eq.s32.totalorder %s21, 0
      %p83 = por %p81, %p82
      %s85 = sadd.s32 %s84, 1
      %p88 = scmp.eq.s32.totalorder %s15, 1
      %p89 = scmp.ne.s32.totalorder %s84, %s86
      %p90 = scmp.eq.s32.totalorder %s15, 0
      %p91 = por %p89, %p90
      %p92 = scmp.ne.s32.totalorder %s84, %s86
      %p93 = scmp.eq.s32.totalorder %s20, 1
      %p94 = por %p92, %p93
      %p95 = scmp.ne.s32.totalorder %s86, %s87
      %p96 = scmp.eq.s32.totalorder %s20, 0
      %p97 = por %p95, %p96
      %p98 = scmp.ne.s32.totalorder %s86, %s87
      %p99 = scmp.eq.s32.totalorder %s21, 1
      %p100 = por %p98, %p99
      %p102 = scmp.ne.s32.totalorder %s87, %s101
      %p103 = scmp.eq.s32.totalorder %s21, 0
      %p104 = por %p102, %p103
      %s106 = sadd.s32 %s105, 1
      %p109 = scmp.eq.s32.totalorder %s15, 1
      %p110 = scmp.ne.s32.totalorder %s105, %s107
      %p111 = scmp.eq.s32.totalorder %s15, 0
      %p112 = por %p110, %p111
      %p113 = scmp.ne.s32.totalorder %s105, %s107
      %p114 = scmp.eq.s32.totalorder %s20, 1
      %p115 = por %p113, %p114
      %p116 = scmp.ne.s32.totalorder %s107, %s108
      %p117 = scmp.eq.s32.totalorder %s20, 0
      %p118 = por %p116, %p117
      %p119 = scmp.ne.s32.totalorder %s107, %s108
      %p120 = scmp.eq.s32.totalorder %s21, 1
      %p121 = por %p119, %p120
      %p123 = scmp.ne.s32.totalorder %s108, %s122
      %p124 = scmp.eq.s32.totalorder %s21, 0
      %p125 = por %p123, %p124
      %s127 = sadd.s32 %s126, 1
      %p130 = scmp.eq.s32.totalorder %s15, 1
      %p131 = scmp.ne.s32.totalorder %s126, %s128
      %p132 = scmp.eq.s32.totalorder %s15, 0
      %p133 = por %p131, %p132
      %p134 = scmp.ne.s32.totalorder %s126, %s128
      %p135 = scmp.eq.s32.totalorder %s20, 1
      %p136 = por %p134, %p135
      %p137 = scmp.ne.s32.totalorder %s128, %s129
      %p138 = scmp.eq.s32.totalorder %s20, 0
      %p139 = por %p137, %p138
      %p140 = scmp.ne.s32.totalorder %s128, %s129
      %p141 = scmp.eq.s32.totalorder %s21, 1
      %p142 = por %p140, %p141
      %p144 = scmp.ne.s32.totalorder %s129, %s143
      %p145 = scmp.eq.s32.totalorder %s21, 0
      %p146 = por %p144, %p145
      %s147 = ssub.s32 %s22, %s34
      %p148 = scmp.eq.s32.totalorder %s147, 0
      %s150 = sadd.s32 %s149, 1
      %s151 = scalar_select %p148, %s149, %s150
      %p154 = pneg %p148
      %p155 = scmp.eq.s32.totalorder %s15, 1
      %p156 = por %p154, %p155
      %p157 = scmp.ne.s32.totalorder %s149, %s152
      %p158 = scmp.eq.s32.totalorder %s15, 0
      %p159 = por %p157, %p158
      %p160 = scmp.ne.s32.totalorder %s149, %s152
      %p161 = scmp.eq.s32.totalorder %s20, 1
      %p162 = por %p160, %p161
      %p163 = scmp.ne.s32.totalorder %s152, %s153
      %p164 = scmp.eq.s32.totalorder %s20, 0
      %p165 = por %p163, %p164
      %p166 = scmp.ne.s32.totalorder %s152, %s153
      %p167 = scmp.eq.s32.totalorder %s21, 1
      %p168 = por %p166, %p167
      %p170 = scmp.ne.s32.totalorder %s153, %s169
      %p171 = scmp.eq.s32.totalorder %s21, 0
      %p172 = por %p170, %p171
      %p173 = scmp.le.s32.totalorder 1, %s15
      %p174 = scmp.lt.s32.totalorder %s15, 3
      %p175 = pnand %p173, %p174
      %p176 = pneg %p175
      // Predicated region
      $region9: #{tpu_custom_call.1} parent=5 // pred_check
        _
      $region10: #{tpu_custom_call.1} parent=5 // pred_check_branch
        %178 = sbr.rel (%p175) target = $region12
      $region11: #{tpu_custom_call.1} parent=5 // pred_region
        %s179 = ssub.s32 %s15, 1
        // Predicated region
        $region13: #{tpu_custom_call.1} parent=11 // pred_check
          %p180 = pneg %p76
        $region14: #{tpu_custom_call.1} parent=11 // pred_check_branch
          %182 = sbr.rel (%p180) target = $region16
        $region15: #{tpu_custom_call.1} parent=11 // pred_region
          _
        $region16: #{tpu_custom_call.1} parent=11 // pred_fallthru
          _
        // Predicated region
        $region17: #{tpu_custom_call.1} parent=11 // pred_check
          %p183 = pneg %p97
        $region18: #{tpu_custom_call.1} parent=11 // pred_check_branch
          %185 = sbr.rel (%p183) target = $region20
        $region19: #{tpu_custom_call.1} parent=11 // pred_region
          _
        $region20: #{tpu_custom_call.1} parent=11 // pred_fallthru
          _
        // Predicated region
        $region21: #{tpu_custom_call.1} parent=11 // pred_check
          %p186 = pneg %p118
        $region22: #{tpu_custom_call.1} parent=11 // pred_check_branch
          %188 = sbr.rel (%p186) target = $region24
        $region23: #{tpu_custom_call.1} parent=11 // pred_region
          _
        $region24: #{tpu_custom_call.1} parent=11 // pred_fallthru
          _
        // Predicated region
        $region25: #{tpu_custom_call.1} parent=11 // pred_check
          %p189 = pneg %p139
        $region26: #{tpu_custom_call.1} parent=11 // pred_check_branch
          %191 = sbr.rel (%p189) target = $region28
        $region27: #{tpu_custom_call.1} parent=11 // pred_region
          _
        $region28: #{tpu_custom_call.1} parent=11 // pred_fallthru
          _
      $region12: #{tpu_custom_call.1} parent=5 // pred_fallthru
        _
      %p192 = scmp.lt.s32.totalorder %s15, 2
      // Predicated region
      $region29: #{tpu_custom_call.1} parent=5 // pred_check
        %p193 = pneg %p192
      $region30: #{tpu_custom_call.1} parent=5 // pred_check_branch
        %195 = sbr.rel (%p193) target = $region32
      $region31: #{tpu_custom_call.1} parent=5 // pred_region
        // Predicated region
        $region33: #{tpu_custom_call.1} parent=31 // pred_check
          %p196 = pneg %p49
        $region34: #{tpu_custom_call.1} parent=31 // pred_check_branch
          %198 = sbr.rel (%p196) target = $region36
        $region35: #{tpu_custom_call.1} parent=31 // pred_region
          %s199 = sand.u32 %s39, 1
          %s200 = scalar_lea.sflag [#allocation4], %s199
          %s201 = sand.u32 %s39, 1
          %s202 = smul.addr %s201, 128
          %s203 = scalar_lea.vmem [#allocation3], %s202
          %s204 = smul.u32 2, %s22
          %s206 = ssub.s32 2048, 2048
          %207 = vsyncadd %s200, %s206
          %s208 = smul.addr %s204, 16
          %s209 = sadd.s32 %s23, %s208
          %s210 = smul.addr %s209, 128
          %s211 = scalar_lea.hbm %s0, %s210
          %s212 = sshll.u32 %s203, 4
          %s213 = int_to_ptr.vmem [resolvable:$true] %s212
          %218 = dma.hbm_to_vmem [thread:$0]  %s211, 2048, %s213, %s200, 256, 128, 8
        $region36: #{tpu_custom_call.1} parent=31 // pred_fallthru
          _
      $region32: #{tpu_custom_call.1} parent=5 // pred_fallthru
        _
      %p219 = scmp.le.s32.totalorder 1, %s15
      %p220 = scmp.lt.s32.totalorder %s15, 3
      %p221 = pnand %p219, %p220
      %p222 = pneg %p221
      // Predicated region
      $region37: #{tpu_custom_call.1} parent=5 // pred_check
        _
      $region38: #{tpu_custom_call.1} parent=5 // pred_check_branch
        %224 = sbr.rel (%p221) target = $region40
      $region39: #{tpu_custom_call.1} parent=5 // pred_region
        %s225 = ssub.s32 %s15, 1
        %s226 = sand.u32 %s42, 1
        %s227 = scalar_lea.sflag [#allocation4], %s226
        %s228 = sand.u32 %s42, 1
        %s229 = smul.addr %s228, 128
        %s230 = scalar_lea.vmem [#allocation3], %s229
        // Predicated region
        $region41: #{tpu_custom_call.1} parent=39 // pred_check
          %p231 = pneg %p55
        $region42: #{tpu_custom_call.1} parent=39 // pred_check_branch
          %233 = sbr.rel (%p231) target = $region44
        $region43: #{tpu_custom_call.1} parent=39 // pred_region
          %234 = dma.done %s227, 2048
        $region44: #{tpu_custom_call.1} parent=39 // pred_fallthru
          _
        %s235 = sand.u32 %s42, 1
        %s236 = scalar_lea.sflag [#allocation4], %s235
        %s237 = sand.u32 %s42, 1
        %s238 = smul.addr %s237, 128
        %s239 = scalar_lea.vmem [#allocation3], %s238
        %p240 = pneg %p55
        %p241 = pneg %p52
        %p242 = pneg %p76
        %p243 = pneg %p73
        %p244 = pneg %p97
        %p245 = pneg %p94
        %p246 = pneg %p118
        %p247 = pneg %p115
        %p248 = pneg %p139
        %p249 = pneg %p136
        %p250 = pneg %p165
        %p251 = pneg %p162
        %s252 = smul.u32 2, %s24
        %p253 = scmp.eq.s32.totalorder %s25, 0
        // Predicated region
        $region45: #{tpu_custom_call.1} parent=39 // pred_check
          %p254 = pneg %p253
        $region46: #{tpu_custom_call.1} parent=39 // pred_check_branch
          %256 = sbr.rel (%p254) target = $region48
        $region47: #{tpu_custom_call.1} parent=39 // pred_region
          %257 = vst [vmem:[#allocation2] sm:$0xff] 0.0
          %258 = vst [vmem:[#allocation2 + $0x8] sm:$0xff] 0.0
          %259 = vst [vmem:[#allocation2 + $0x10] sm:$0xff] 0.0
          %260 = vst [vmem:[#allocation2 + $0x18] sm:$0xff] 0.0
          %261 = vst [vmem:[#allocation2 + $0x20] sm:$0xff] 0.0
          %262 = vst [vmem:[#allocation2 + $0x28] sm:$0xff] 0.0
          %263 = vst [vmem:[#allocation2 + $0x30] sm:$0xff] 0.0
          %264 = vst [vmem:[#allocation2 + $0x38] sm:$0xff] 0.0
          %265 = vst [vmem:[#allocation2 + $0x40] sm:$0xff] 0.0
          %266 = vst [vmem:[#allocation2 + $0x48] sm:$0xff] 0.0
          %267 = vst [vmem:[#allocation2 + $0x50] sm:$0xff] 0.0
          %268 = vst [vmem:[#allocation2 + $0x58] sm:$0xff] 0.0
          %269 = vst [vmem:[#allocation2 + $0x60] sm:$0xff] 0.0
          %270 = vst [vmem:[#allocation2 + $0x68] sm:$0xff] 0.0
          %271 = vst [vmem:[#allocation2 + $0x70] sm:$0xff] 0.0
          %272 = vst [vmem:[#allocation2 + $0x78] sm:$0xff] 0.0
        $region48: #{tpu_custom_call.1} parent=39 // pred_fallthru
          _
        %v273 = vld [vmem:[%s230] sm:$0xff]
        %v274 = vld [vmem:[%s230 + $0x8] sm:$0xff]
        %v275 = vld [vmem:[%s230 + $0x10] sm:$0xff]
        %v276 = vld [vmem:[%s230 + $0x18] sm:$0xff]
        %v277 = vld [vmem:[%s230 + $0x20] sm:$0xff]
        %v278 = vld [vmem:[%s230 + $0x28] sm:$0xff]
        %v279 = vld [vmem:[%s230 + $0x30] sm:$0xff]
        %v280 = vld [vmem:[%s230 + $0x38] sm:$0xff]
        %v281 = vld [vmem:[%s230 + $0x40] sm:$0xff]
        %v282 = vld [vmem:[%s230 + $0x48] sm:$0xff]
        %v283 = vld [vmem:[%s230 + $0x50] sm:$0xff]
        %v284 = vld [vmem:[%s230 + $0x58] sm:$0xff]
        %v285 = vld [vmem:[%s230 + $0x60] sm:$0xff]
        %v286 = vld [vmem:[%s230 + $0x68] sm:$0xff]
        %v287 = vld [vmem:[%s230 + $0x70] sm:$0xff]
        %v288 = vld [vmem:[%s230 + $0x78] sm:$0xff]
        %v289 = vld [vmem:[#allocation2] sm:$0xff]
        %v290 = vld [vmem:[#allocation2 + $0x8] sm:$0xff]
        %v291 = vld [vmem:[#allocation2 + $0x10] sm:$0xff]
        %v292 = vld [vmem:[#allocation2 + $0x18] sm:$0xff]
        %v293 = vld [vmem:[#allocation2 + $0x20] sm:$0xff]
        %v294 = vld [vmem:[#allocation2 + $0x28] sm:$0xff]
        %v295 = vld [vmem:[#allocation2 + $0x30] sm:$0xff]
        %v296 = vld [vmem:[#allocation2 + $0x38] sm:$0xff]
        %v297 = vld [vmem:[#allocation2 + $0x40] sm:$0xff]
        %v298 = vld [vmem:[#allocation2 + $0x48] sm:$0xff]
        %v299 = vld [vmem:[#allocation2 + $0x50] sm:$0xff]
        %v300 = vld [vmem:[#allocation2 + $0x58] sm:$0xff]
        %v301 = vld [vmem:[#allocation2 + $0x60] sm:$0xff]
        %v302 = vld [vmem:[#allocation2 + $0x68] sm:$0xff]
        %v303 = vld [vmem:[#allocation2 + $0x70] sm:$0xff]
        %v304 = vld [vmem:[#allocation2 + $0x78] sm:$0xff]
        %v305 = vadd.f32 %v289, %v273
        %v306 = vadd.f32 %v290, %v274
        %v307 = vadd.f32 %v291, %v275
        %v308 = vadd.f32 %v292, %v276
        %v309 = vadd.f32 %v293, %v277
        %v310 = vadd.f32 %v294, %v278
        %v311 = vadd.f32 %v295, %v279
        %v312 = vadd.f32 %v296, %v280
        %v313 = vadd.f32 %v297, %v281
        %v314 = vadd.f32 %v298, %v282
        %v315 = vadd.f32 %v299, %v283
        %v316 = vadd.f32 %v300, %v284
        %v317 = vadd.f32 %v301, %v285
        %v318 = vadd.f32 %v302, %v286
        %v319 = vadd.f32 %v303, %v287
        %v320 = vadd.f32 %v304, %v288
        %321 = vst [vmem:[#allocation2] sm:$0xff] %v305
        %322 = vst [vmem:[#allocation2 + $0x8] sm:$0xff] %v306
        %323 = vst [vmem:[#allocation2 + $0x10] sm:$0xff] %v307
        %324 = vst [vmem:[#allocation2 + $0x18] sm:$0xff] %v308
        %325 = vst [vmem:[#allocation2 + $0x20] sm:$0xff] %v309
        %326 = vst [vmem:[#allocation2 + $0x28] sm:$0xff] %v310
        %327 = vst [vmem:[#allocation2 + $0x30] sm:$0xff] %v311
        %328 = vst [vmem:[#allocation2 + $0x38] sm:$0xff] %v312
        %329 = vst [vmem:[#allocation2 + $0x40] sm:$0xff] %v313
        %330 = vst [vmem:[#allocation2 + $0x48] sm:$0xff] %v314
        %331 = vst [vmem:[#allocation2 + $0x50] sm:$0xff] %v315
        %332 = vst [vmem:[#allocation2 + $0x58] sm:$0xff] %v316
        %333 = vst [vmem:[#allocation2 + $0x60] sm:$0xff] %v317
        %334 = vst [vmem:[#allocation2 + $0x68] sm:$0xff] %v318
        %335 = vst [vmem:[#allocation2 + $0x70] sm:$0xff] %v319
        %336 = vst [vmem:[#allocation2 + $0x78] sm:$0xff] %v320
        %p337 = scmp.eq.s32.totalorder %s25, 1
        // Predicated region
        $region49: #{tpu_custom_call.1} parent=39 // pred_check
          %p338 = pneg %p337
        $region50: #{tpu_custom_call.1} parent=39 // pred_check_branch
          %340 = sbr.rel (%p338) target = $region52
        $region51: #{tpu_custom_call.1} parent=39 // pred_region
          %v341 = vld [vmem:[#allocation2] sm:$0xff]
          %v342 = vld [vmem:[#allocation2 + $0x8] sm:$0xff]
          %v343 = vld [vmem:[#allocation2 + $0x10] sm:$0xff]
          %v344 = vld [vmem:[#allocation2 + $0x18] sm:$0xff]
          %v345 = vld [vmem:[#allocation2 + $0x20] sm:$0xff]
          %v346 = vld [vmem:[#allocation2 + $0x28] sm:$0xff]
          %v347 = vld [vmem:[#allocation2 + $0x30] sm:$0xff]
          %v348 = vld [vmem:[#allocation2 + $0x38] sm:$0xff]
          %v349 = vld [vmem:[#allocation2 + $0x40] sm:$0xff]
          %v350 = vld [vmem:[#allocation2 + $0x48] sm:$0xff]
          %v351 = vld [vmem:[#allocation2 + $0x50] sm:$0xff]
          %v352 = vld [vmem:[#allocation2 + $0x58] sm:$0xff]
          %v353 = vld [vmem:[#allocation2 + $0x60] sm:$0xff]
          %v354 = vld [vmem:[#allocation2 + $0x68] sm:$0xff]
          %v355 = vld [vmem:[#allocation2 + $0x70] sm:$0xff]
          %v356 = vld [vmem:[#allocation2 + $0x78] sm:$0xff]
          %357 = vadd.xlane.f32.xlu0 %v341
          %v358 = vpop.xlane.xlu0 %357
          %359 = vadd.xlane.f32.xlu0 %v342
          %v360 = vpop.xlane.xlu0 %359
          %361 = vadd.xlane.f32.xlu0 %v343
          %v362 = vpop.xlane.xlu0 %361
          %363 = vadd.xlane.f32.xlu0 %v344
          %v364 = vpop.xlane.xlu0 %363
          %365 = vadd.xlane.f32.xlu0 %v345
          %v366 = vpop.xlane.xlu0 %365
          %367 = vadd.xlane.f32.xlu0 %v346
          %v368 = vpop.xlane.xlu0 %367
          %369 = vadd.xlane.f32.xlu0 %v347
          %v370 = vpop.xlane.xlu0 %369
          %371 = vadd.xlane.f32.xlu0 %v348
          %v372 = vpop.xlane.xlu0 %371
          %373 = vadd.xlane.f32.xlu0 %v349
          %v374 = vpop.xlane.xlu0 %373
          %375 = vadd.xlane.f32.xlu0 %v350
          %v376 = vpop.xlane.xlu0 %375
          %377 = vadd.xlane.f32.xlu0 %v351
          %v378 = vpop.xlane.xlu0 %377
          %379 = vadd.xlane.f32.xlu0 %v352
          %v380 = vpop.xlane.xlu0 %379
          %381 = vadd.xlane.f32.xlu0 %v353
          %v382 = vpop.xlane.xlu0 %381
          %383 = vadd.xlane.f32.xlu0 %v354
          %v384 = vpop.xlane.xlu0 %383
          %385 = vadd.xlane.f32.xlu0 %v355
          %v386 = vpop.xlane.xlu0 %385
          %387 = vadd.xlane.f32.xlu0 %v356
          %v388 = vpop.xlane.xlu0 %387
          %v389 = vmul.f32 %v358, 0.00390625
          %v390 = vmul.f32 %v360, 0.00390625
          %v391 = vmul.f32 %v362, 0.00390625
          %v392 = vmul.f32 %v364, 0.00390625
          %v393 = vmul.f32 %v366, 0.00390625
          %v394 = vmul.f32 %v368, 0.00390625
          %v395 = vmul.f32 %v370, 0.00390625
          %v396 = vmul.f32 %v372, 0.00390625
          %v397 = vmul.f32 %v374, 0.00390625
          %v398 = vmul.f32 %v376, 0.00390625
          %v399 = vmul.f32 %v378, 0.00390625
          %v400 = vmul.f32 %v380, 0.00390625
          %v401 = vmul.f32 %v382, 0.00390625
          %v402 = vmul.f32 %v384, 0.00390625
          %v403 = vmul.f32 %v386, 0.00390625
          %v404 = vmul.f32 %v388, 0.00390625
          %v405 = vld [vmem:[%s1] sm:$0xff]
          %v406 = vld [vmem:[%s1 + $0x8] sm:$0xff]
          %v407 = vld [vmem:[%s1 + $0x10] sm:$0xff]
          %v408 = vld [vmem:[%s1 + $0x18] sm:$0xff]
          %v409 = vld [vmem:[%s1 + $0x20] sm:$0xff]
          %v410 = vld [vmem:[%s1 + $0x28] sm:$0xff]
          %v411 = vld [vmem:[%s1 + $0x30] sm:$0xff]
          %v412 = vld [vmem:[%s1 + $0x38] sm:$0xff]
          %v413 = vld [vmem:[%s2] sm:$0x1]
          %v415 = vlaneseq
          %v416 = vshrl.u32 %v415, 7
          %v417 = vsub.s32 0, %v416
          %v418 = vrot.slane %v413, %v417
          %v436 = vlaneseq
          %v437 = vand.u32 %v436, 127
          %v438 = vlaneseq
          %v439 = vshrl.u32 %v438, 7
          %v440 = vsub.s32 %v437, %v439
          %v441 = vrot.slane %v389, %v440
          %v442 = vadd.s32 %v437, 4294967288
          %v443 = vlaneseq
          %v444 = vshrl.u32 %v443, 7
          %v445 = vsub.s32 %v442, %v444
          %v446 = vrot.slane %v390, %v445
          %vm447 = vcmask 130112
          %v448 = vsel %vm447, %v446, %v441
          %v449 = vadd.s32 %v437, 4294967280
          %v450 = vlaneseq
          %v451 = vshrl.u32 %v450, 7
          %v452 = vsub.s32 %v449, %v451
          %v453 = vrot.slane %v391, %v452
          %vm454 = vcmask 195712
          %v455 = vsel %vm454, %v453, %v448
          %v456 = vadd.s32 %v437, 4294967272
          %v457 = vlaneseq
          %v458 = vshrl.u32 %v457, 7
          %v459 = vsub.s32 %v456, %v458
          %v460 = vrot.slane %v392, %v459
          %vm461 = vcmask 261312
          %v462 = vsel %vm461, %v460, %v455
          %v463 = vadd.s32 %v437, 4294967264
          %v464 = vlaneseq
          %v465 = vshrl.u32 %v464, 7
          %v466 = vsub.s32 %v463, %v465
          %v467 = vrot.slane %v393, %v466
          %vm468 = vcmask 326912
          %v469 = vsel %vm468, %v467, %v462
          %v470 = vadd.s32 %v437, 4294967256
          %v471 = vlaneseq
          %v472 = vshrl.u32 %v471, 7
          %v473 = vsub.s32 %v470, %v472
          %v474 = vrot.slane %v394, %v473
          %vm475 = vcmask 392512
          %v476 = vsel %vm475, %v474, %v469
          %v477 = vadd.s32 %v437, 4294967248
          %v478 = vlaneseq
          %v479 = vshrl.u32 %v478, 7
          %v480 = vsub.s32 %v477, %v479
          %v481 = vrot.slane %v395, %v480
          %vm482 = vcmask 458112
          %v483 = vsel %vm482, %v481, %v476
          %v484 = vadd.s32 %v437, 4294967240
          %v485 = vlaneseq
          %v486 = vshrl.u32 %v485, 7
          %v487 = vsub.s32 %v484, %v486
          %v488 = vrot.slane %v396, %v487
          %vm489 = vcmask 523712
          %v490 = vsel %vm489, %v488, %v483
          %v491 = vlaneseq
          %v492 = vshrl.u32 %v491, 7
          %v493 = vsub.s32 %v437, %v492
          %v494 = vrot.slane %v397, %v493
          %v495 = vlaneseq
          %v496 = vshrl.u32 %v495, 7
          %v497 = vsub.s32 %v442, %v496
          %v498 = vrot.slane %v398, %v497
          %v499 = vsel %vm447, %v498, %v494
          %v500 = vlaneseq
          %v501 = vshrl.u32 %v500, 7
          %v502 = vsub.s32 %v449, %v501
          %v503 = vrot.slane %v399, %v502
          %v504 = vsel %vm454, %v503, %v499
          %v505 = vlaneseq
          %v506 = vshrl.u32 %v505, 7
          %v507 = vsub.s32 %v456, %v506
          %v508 = vrot.slane %v400, %v507
          %v509 = vsel %vm461, %v508, %v504
          %v510 = vlaneseq
          %v511 = vshrl.u32 %v510, 7
          %v512 = vsub.s32 %v463, %v511
          %v513 = vrot.slane %v401, %v512
          %v514 = vsel %vm468, %v513, %v509
          %v515 = vlaneseq
          %v516 = vshrl.u32 %v515, 7
          %v517 = vsub.s32 %v470, %v516
          %v518 = vrot.slane %v402, %v517
          %v519 = vsel %vm475, %v518, %v514
          %v520 = vlaneseq
          %v521 = vshrl.u32 %v520, 7
          %v522 = vsub.s32 %v477, %v521
          %v523 = vrot.slane %v403, %v522
          %v524 = vsel %vm482, %v523, %v519
          %v525 = vlaneseq
          %v526 = vshrl.u32 %v525, 7
          %v527 = vsub.s32 %v484, %v526
          %v528 = vrot.slane %v404, %v527
          %v529 = vsel %vm489, %v528, %v524
          %vm530 = vcmask 1041409
          %v531 = vsel %vm530, %v529, %v490
          %vm532 = vcmask 523264
          %v533 = vsel %vm532, %v531, 0
          %535 = vmatprep.subr.mxu0 0.0
          %536 = vmatpush1.msra.mxu0 0.0
          %537 = vmatprep.subr.mxu0 0.0
          %538 = vmatpush1.msra.mxu0 0.0
          %539 = vmatprep.subr.mxu0 0.0
          %540 = vmatpush1.msra.mxu0 0.0
          %541 = vmatprep.subr.mxu0 0.0
          %542 = vmatpush1.msra.mxu0 0.0
          %543 = vmatprep.subr.mxu0 0.0
          %544 = vmatpush1.msra.mxu0 0.0
          %545 = vmatprep.subr.mxu0 0.0
          %546 = vmatpush1.msra.mxu0 0.0
          %547 = vmatprep.subr.mxu0 0.0
          %548 = vmatpush1.msra.mxu0 0.0
          %549 = vmatprep.subr.mxu0 0.0
          %550 = vmatpush1.msra.mxu0 0.0
          %551 = vmatprep.subr.mxu0 0.0
          %552 = vmatpush1.msra.mxu0 %v412
          %553 = vmatprep.subr.mxu0 0.0
          %554 = vmatpush1.msra.mxu0 %v411
          %555 = vmatprep.subr.mxu0 0.0
          %556 = vmatpush1.msra.mxu0 %v410
          %557 = vmatprep.subr.mxu0 0.0
          %558 = vmatpush1.msra.mxu0 %v409
          %559 = vmatprep.subr.mxu0 0.0
          %560 = vmatpush1.msra.mxu0 %v408
          %561 = vmatprep.subr.mxu0 0.0
          %562 = vmatpush1.msra.mxu0 %v407
          %563 = vmatprep.subr.mxu0 0.0
          %564 = vmatpush1.msra.mxu0 %v406
          %565 = vmatprep.subr.mxu0 0.0
          %566 = vmatpush1.msra.mxu0 %v405
          %567 = vmatprep.subr.mxu0 0.0
          %568 = vmatpush2.msra.mxu0 0.0
          %569 = vmatprep.subr.mxu0 0.0
          %570 = vmatpush2.msra.mxu0 0.0
          %571 = vmatprep.subr.mxu0 0.0
          %572 = vmatpush2.msra.mxu0 0.0
          %573 = vmatprep.subr.mxu0 0.0
          %574 = vmatpush2.msra.mxu0 0.0
          %575 = vmatprep.subr.mxu0 0.0
          %576 = vmatpush2.msra.mxu0 0.0
          %577 = vmatprep.subr.mxu0 0.0
          %578 = vmatpush2.msra.mxu0 0.0
          %579 = vmatprep.subr.mxu0 0.0
          %580 = vmatpush2.msra.mxu0 0.0
          %581 = vmatprep.subr.mxu0 0.0
          %582 = vmatpush2.msra.mxu0 0.0
          %583 = vmatprep.subr.mxu0 0.0
          %584 = vmatpush2.msra.mxu0 0.0
          %585 = vmatprep.subr.mxu0 0.0
          %586 = vmatpush2.msra.mxu0 0.0
          %587 = vmatprep.subr.mxu0 0.0
          %588 = vmatpush2.msra.mxu0 0.0
          %589 = vmatprep.subr.mxu0 0.0
          %590 = vmatpush2.msra.mxu0 0.0
          %591 = vmatprep.subr.mxu0 0.0
          %592 = vmatpush2.msra.mxu0 0.0
          %593 = vmatprep.subr.mxu0 0.0
          %594 = vmatpush2.msra.mxu0 0.0
          %595 = vmatprep.subr.mxu0 0.0
          %596 = vmatpush2.msra.mxu0 0.0
          %597 = vmatprep.subr.mxu0 0.0
          %598 = vmatpush2.msra.mxu0 0.0
          %599 = vmatprep.mubr.f32.mxu0 0.0
          %600 = vmatmul.mubr.f32.gmra.mxu0 %v533
          %v601 = vpop.f32.mrf.mxu0
          %v602 = vadd.f32 %v418, %v601
          %v603 = vpop.f32.mrf.mxu0
          %604 = vdwg.mxu0
          %v605 = vmax.f32 %v602, 0.0
          %v606 = vld [vmem:[%s3] sm:$0xf]
          %v607 = vld [vmem:[%s4] sm:$0x1]
          %v609 = vlaneseq
          %v610 = vshrl.u32 %v609, 7
          %v611 = vsub.s32 0, %v610
          %v612 = vrot.slane %v607, %v611
          %vm614 = vcmask 31744
          %v616 = vsel %vm614, %v605, 0
          %vm618 = vcmask 1043456
          %v620 = vsel %vm618, %v606, 0
          %622 = vmatprep.subr.mxu0 0.0
          %623 = vmatpush1.msra.mxu0 0.0
          %624 = vmatprep.subr.mxu0 0.0
          %625 = vmatpush1.msra.mxu0 0.0
          %626 = vmatprep.subr.mxu0 0.0
          %627 = vmatpush1.msra.mxu0 0.0
          %628 = vmatprep.subr.mxu0 0.0
          %629 = vmatpush1.msra.mxu0 0.0
          %630 = vmatprep.subr.mxu0 0.0
          %631 = vmatpush1.msra.mxu0 0.0
          %632 = vmatprep.subr.mxu0 0.0
          %633 = vmatpush1.msra.mxu0 0.0
          %634 = vmatprep.subr.mxu0 0.0
          %635 = vmatpush1.msra.mxu0 0.0
          %636 = vmatprep.subr.mxu0 0.0
          %637 = vmatpush1.msra.mxu0 0.0
          %638 = vmatprep.subr.mxu0 0.0
          %639 = vmatpush1.msra.mxu0 0.0
          %640 = vmatprep.subr.mxu0 0.0
          %641 = vmatpush1.msra.mxu0 0.0
          %642 = vmatprep.subr.mxu0 0.0
          %643 = vmatpush1.msra.mxu0 0.0
          %644 = vmatprep.subr.mxu0 0.0
          %645 = vmatpush1.msra.mxu0 0.0
          %646 = vmatprep.subr.mxu0 0.0
          %647 = vmatpush1.msra.mxu0 0.0
          %648 = vmatprep.subr.mxu0 0.0
          %649 = vmatpush1.msra.mxu0 0.0
          %650 = vmatprep.subr.mxu0 0.0
          %651 = vmatpush1.msra.mxu0 0.0
          %652 = vmatprep.subr.mxu0 0.0
          %653 = vmatpush1.msra.mxu0 %v620
          %654 = vmatprep.subr.mxu0 0.0
          %655 = vmatpush2.msra.mxu0 0.0
          %656 = vmatprep.subr.mxu0 0.0
          %657 = vmatpush2.msra.mxu0 0.0
          %658 = vmatprep.subr.mxu0 0.0
          %659 = vmatpush2.msra.mxu0 0.0
          %660 = vmatprep.subr.mxu0 0.0
          %661 = vmatpush2.msra.mxu0 0.0
          %662 = vmatprep.subr.mxu0 0.0
          %663 = vmatpush2.msra.mxu0 0.0
          %664 = vmatprep.subr.mxu0 0.0
          %665 = vmatpush2.msra.mxu0 0.0
          %666 = vmatprep.subr.mxu0 0.0
          %667 = vmatpush2.msra.mxu0 0.0
          %668 = vmatprep.subr.mxu0 0.0
          %669 = vmatpush2.msra.mxu0 0.0
          %670 = vmatprep.subr.mxu0 0.0
          %671 = vmatpush2.msra.mxu0 0.0
          %672 = vmatprep.subr.mxu0 0.0
          %673 = vmatpush2.msra.mxu0 0.0
          %674 = vmatprep.subr.mxu0 0.0
          %675 = vmatpush2.msra.mxu0 0.0
          %676 = vmatprep.subr.mxu0 0.0
          %677 = vmatpush2.msra.mxu0 0.0
          %678 = vmatprep.subr.mxu0 0.0
          %679 = vmatpush2.msra.mxu0 0.0
          %680 = vmatprep.subr.mxu0 0.0
          %681 = vmatpush2.msra.mxu0 0.0
          %682 = vmatprep.subr.mxu0 0.0
          %683 = vmatpush2.msra.mxu0 0.0
          %684 = vmatprep.subr.mxu0 0.0
          %685 = vmatpush2.msra.mxu0 0.0
          %686 = vmatprep.mubr.f32.mxu0 0.0
          %687 = vmatmul.mubr.f32.gmra.mxu0 %v616
          %v688 = vpop.f32.mrf.mxu0
          %v689 = vadd.f32 %v612, %v688
          %v690 = vpop.f32.mrf.mxu0
          %691 = vdwg.mxu0
          %vm692 = vcmask 517120
          %693 = vst.msk [vmem:[#allocation6] sm:$0x3] %vm692, %v689
        $region52: #{tpu_custom_call.1} parent=39 // pred_fallthru
          _
        // Predicated region
        $region53: #{tpu_custom_call.1} parent=39 // pred_check
          %p694 = pneg %p162
        $region54: #{tpu_custom_call.1} parent=39 // pred_check_branch
          %696 = sbr.rel (%p694) target = $region56
        $region55: #{tpu_custom_call.1} parent=39 // pred_region
          %s698 = ssub.s32 32, 32
          %699 = vsyncadd [#allocation5], %s698
          %s700 = smul.addr %s24, 32
          %s701 = scalar_lea.hbm %s5, %s700
          %s703 = sshll.u32 [#allocation6], 4
          %s704 = int_to_ptr.vmem [resolvable:$true] %s703
          %706 = dma.vmem_to_hbm [thread:$0]  %s704, 32, %s701, [#allocation5]
        $region56: #{tpu_custom_call.1} parent=39 // pred_fallthru
          _
        // Predicated region
        $region57: #{tpu_custom_call.1} parent=39 // pred_check
          %p707 = pneg %p162
        $region58: #{tpu_custom_call.1} parent=39 // pred_check_branch
          %709 = sbr.rel (%p707) target = $region60
        $region59: #{tpu_custom_call.1} parent=39 // pred_region
          %710 = dma.done [#allocation5], 32
        $region60: #{tpu_custom_call.1} parent=39 // pred_fallthru
          _
      $region40: #{tpu_custom_call.1} parent=5 // pred_fallthru
        _
      %p711 = scmp.le.s32.totalorder 2, %s15
      // Predicated region
      $region61: #{tpu_custom_call.1} parent=5 // pred_check
        %p712 = pneg %p711
      $region62: #{tpu_custom_call.1} parent=5 // pred_check_branch
        %714 = sbr.rel (%p712) target = $region64
      $region63: #{tpu_custom_call.1} parent=5 // pred_region
        %s715 = ssub.s32 %s15, 2
      $region64: #{tpu_custom_call.1} parent=5 // pred_fallthru
        _
    $region6: #{tpu_custom_call.1} parent=1 // loop_footer
      %s19 = sadd.s32 1, %s15
    $region7: #{tpu_custom_call.1} parent=1 // loop_footer_branch
      %14 = sbr.rel target = $region3
    $region8: #{tpu_custom_call.1} parent=1 // loop_exit
      _
    %716 = vsyncpa [#allocation4], 1
    %s717 = scalar_lea.sflag [#allocation4], 1
    %718 = vsyncpa %s717, 1
    %719 = vsyncpa [#allocation5], 1
    %s720 = scalar_lea.sflag [#allocation5], 1
    %721 = vsyncpa %s720, 1

</llo_original>
